<compile_context>
chip_gen: v7x
topology: tpu7x:2x2x1
jax: 0.10.0
libtpu: 0.0.40
codegen_flags: <defaults>
</compile_context>

<pallas_src>
import math

import jax
import jax.numpy as jnp
from jax.experimental import pallas as pl
from jax.experimental.pallas import tpu as pltpu


def _gelu_tanh(h):
    # TODO(synk): nn.GELU() default is the exact erf formulation; the tanh
    # approximation is used for guaranteed Mosaic lowering (max abs err ~1e-3).
    c = 0.7978845608028654  # sqrt(2/pi)
    return 0.5 * h * (1.0 + jnp.tanh(c * (h + 0.044715 * h * h * h)))


def _mlp_partial(x_ref, w1_ref, b1_ref, w2_ref):
    """fc1 -> GELU -> (partial) fc2 for one hidden slab; returns f32 (tm, Dout)."""
    h = jnp.dot(x_ref[...], w1_ref[...], preferred_element_type=jnp.float32)
    h = h + b1_ref[...].astype(jnp.float32)
    h = _gelu_tanh(h)
    # TODO(synk): dropout (p=0.1) is stochastic; treated as inference-mode identity.
    return jnp.dot(
        h.astype(w2_ref.dtype), w2_ref[...], preferred_element_type=jnp.float32
    )


def _mlp_kernel_single(x_ref, w1_ref, b1_ref, w2_ref, b2_ref, o_ref):
    """Single pass over the full hidden dimension (weights resident in VMEM)."""
    part = _mlp_partial(x_ref, w1_ref, b1_ref, w2_ref)
    o_ref[...] = (part + b2_ref[...].astype(jnp.float32)).astype(o_ref.dtype)


def _mlp_kernel_reduce_f32(x_ref, w1_ref, b1_ref, w2_ref, b2_ref, o_ref):
    """Hidden-axis reduction; f32 output accumulates directly in o_ref."""
    k = pl.program_id(1)

    @pl.when(k == 0)
    def _init():
        o_ref[...] = jnp.zeros_like(o_ref) + b2_ref[...].astype(o_ref.dtype)

    o_ref[...] += _mlp_partial(x_ref, w1_ref, b1_ref, w2_ref)


def _mlp_kernel_reduce_acc(x_ref, w1_ref, b1_ref, w2_ref, b2_ref, o_ref, acc_ref):
    """Hidden-axis reduction with a f32 VMEM accumulator (non-f32 outputs)."""
    k = pl.program_id(1)

    @pl.when(k == 0)
    def _init():
        acc_ref[...] = jnp.zeros_like(acc_ref)

    acc_ref[...] += _mlp_partial(x_ref, w1_ref, b1_ref, w2_ref)

    @pl.when(k == pl.num_programs(1) - 1)
    def _finalize():
        o_ref[...] = (acc_ref[...] + b2_ref[...].astype(jnp.float32)).astype(o_ref.dtype)


def _round_up(x, m):
    return (x + m - 1) // m * m


def _vmem_capacity_bytes():
    try:
        return int(pltpu.get_tpu_info().vmem_capacity_bytes)
    except Exception:
        return 64 * 1024 * 1024  # conservative (v7x per-TensorCore)


def mlp_forward(x, w1, b1, w2, b2, *, tm=None, th=None, matmul_dtype=None):
    """Fused MLP forward: gelu(x @ w1 + b1) @ w2 + b2 (dropout = identity).

    matmul_dtype: optional MXU operand dtype (e.g. jnp.bfloat16 on v5e/v6e for
    2-4x MXU rate and half the weight HBM traffic). Bias add, GELU and the
    matmul accumulation stay in float32; the output keeps x.dtype.
    """
    *lead, D = x.shape
    M = math.prod(lead) if lead else 1
    H, Dout = w1.shape[1], w2.shape[1]
    assert w1.shape == (D, H) and w2.shape == (H, Dout)
    assert b1.shape == (H,) and b2.shape == (Dout,)

    out_dtype = x.dtype
    x2 = x.reshape(M, D)
    if matmul_dtype is not None:
        x2 = x2.astype(matmul_dtype)
        w1 = w1.astype(matmul_dtype)
        w2 = w2.astype(matmul_dtype)
    b1_2 = b1.reshape(1, H)
    b2_2 = b2.reshape(1, Dout)

    op_isz = jnp.dtype(x2.dtype).itemsize
    out_isz = jnp.dtype(out_dtype).itemsize
    sub = max(8, 32 // op_isz)  # sublane multiple: 8 (f32), 16 (bf16), 32 (int8/fp8)
    out_is_f32 = jnp.dtype(out_dtype) == jnp.dtype(jnp.float32)

    vmem_cap = _vmem_capacity_bytes()
    budget = max(int(vmem_cap * 0.80), 16 * 1024 * 1024)

    def _block_bytes(tm_, th_):
        single = th_ == H
        b = 2 * (tm_ * D + D * th_ + th_ * Dout) * op_isz  # x / w1 / w2 (double-buffered)
        b += 2 * tm_ * Dout * out_isz                      # output tile
        b += 2 * (th_ + Dout) * 4                          # biases
        if (not single) and (not out_is_f32):
            b += tm_ * Dout * 4                            # f32 accumulator scratch
        return b

    # ---- tile selection: largest token tile first, VMEM-budget aware --------
    M_aligned = _round_up(M, sub)
    if tm is not None:
        tm_cands = [tm]
    else:
        tm_hi = M_aligned
        # Small-VMEM chips (v7x: 64 MiB/TC, 2 TCs) -> keep >= 2 row tiles so the
        # "parallel" token axis can feed both TensorCores.
        if vmem_cap <= 64 * 1024 * 1024 and M_aligned >= 2 * sub:
            tm_hi = min(tm_hi, _round_up(-(-M_aligned // 2), sub))
        tm_cands = sorted(
            {min(c, tm_hi)
             for c in (1024, 768, 512, 384, 256, 192, 128, 96, 64, 32, 16, 8)
             if c % sub == 0} | {tm_hi},
            reverse=True,
        )
    if th is not None:
        assert th == H or (H % th == 0 and th % 128 == 0)
        th_cands = [th]
    else:
        th_cands = [H]  # single-pass fast path preferred when it fits
        if H % 128 == 0:
            th_cands += [c for c in (2048, 1024, 512, 256, 128) if c < H and H % c == 0]

    chosen = None
    for tm_ in tm_cands:          # token tile dominates arithmetic intensity
        for th_ in th_cands:      # then the largest hidden slab that fits
            if _block_bytes(tm_, th_) <= budget:
                chosen = (tm_, th_)
                break
        if chosen is not None:
            break
    if chosen is None:
        chosen = (tm_cands[-1], th_cands[-1])
    tm_, th_ = chosen
    single_pass = th_ == H

    # Pad the token axis so every (tm, D) block is full (handles ragged M, e.g. 197).
    M_pad = _round_up(M, tm_)
    if M_pad != M:
        x2 = jnp.pad(x2, ((0, M_pad - M), (0, 0)))

    vmem_limit = int(min(vmem_cap, max(_block_bytes(tm_, th_) + (4 << 20), 32 << 20)))

    if single_pass:
        out = pl.pallas_call(
            _mlp_kernel_single,
            out_shape=jax.ShapeDtypeStruct((M_pad, Dout), out_dtype),
            grid=(M_pad // tm_,),
            in_specs=[
                pl.BlockSpec((tm_, D), lambda i: (i, 0)),     # x row tile (full D)
                pl.BlockSpec((D, H), lambda i: (0, 0)),       # full fc1 weight
                pl.BlockSpec((1, H), lambda i: (0, 0)),       # fc1 bias
                pl.BlockSpec((H, Dout), lambda i: (0, 0)),    # full fc2 weight
                pl.BlockSpec((1, Dout), lambda i: (0, 0)),    # fc2 bias
            ],
            out_specs=pl.BlockSpec((tm_, Dout), lambda i: (i, 0)),
            compiler_params=pltpu.CompilerParams(
                dimension_semantics=("parallel",),
                vmem_limit_bytes=vmem_limit,
            ),
        )(x2, w1, b1_2, w2, b2_2)
    else:
        kernel = _mlp_kernel_reduce_f32 if out_is_f32 else _mlp_kernel_reduce_acc
        scratch = [] if out_is_f32 else [pltpu.VMEM((tm_, Dout), jnp.float32)]
        # TODO(synk): if profiling shows exposed weight DMA on v5e/v6e, bump the
        # w1/w2 specs to pipeline_mode=pl.Buffered(3) (not on v7x: VMEM-bound).
        out = pl.pallas_call(
            kernel,
            out_shape=jax.ShapeDtypeStruct((M_pad, Dout), out_dtype),
            grid=(M_pad // tm_, H // th_),
            in_specs=[
                pl.BlockSpec((tm_, D), lambda i, k: (i, 0)),      # x row tile
                pl.BlockSpec((D, th_), lambda i, k: (0, k)),      # fc1 weight slab
                pl.BlockSpec((1, th_), lambda i, k: (0, k)),      # fc1 bias slab
                pl.BlockSpec((th_, Dout), lambda i, k: (k, 0)),   # fc2 weight slab
                pl.BlockSpec((1, Dout), lambda i, k: (0, 0)),     # fc2 bias (full)
            ],
            out_specs=pl.BlockSpec((tm_, Dout), lambda i, k: (i, 0)),
            scratch_shapes=scratch,
            compiler_params=pltpu.CompilerParams(
                dimension_semantics=("parallel", "arbitrary"),
                vmem_limit_bytes=vmem_limit,
            ),
        )(x2, w1, b1_2, w2, b2_2)

    if M_pad != M:
        out = out[:M]
    return out.reshape(*lead, Dout)


if __name__ == "__main__":
    # Small shapes consistent with the module: (batch, seq, in_features),
    # hidden = 4 * in_features. D is a multiple of 128 for lane-dense tiles.
    B, P, D, H = 2, 8, 128, 512

    key = jax.random.PRNGKey(0)
    kx, k1, k2, k3, k4 = jax.random.split(key, 5)
    x = jax.random.normal(kx, (B, P, D), dtype=jnp.float32)
    w1 = jax.random.normal(k1, (D, H), dtype=jnp.float32) * (1.0 / math.sqrt(D))
    b1 = jax.random.normal(k2, (H,), dtype=jnp.float32) * 0.01
    w2 = jax.random.normal(k3, (H, D), dtype=jnp.float32) * (1.0 / math.sqrt(H))
    b2 = jax.random.normal(k4, (D,), dtype=jnp.float32) * 0.01

    def ref_mlp(xv):
        h = xv.reshape(-1, D).astype(jnp.float32) @ w1 + b1
        return (_gelu_tanh(h) @ w2 + b2).reshape(*xv.shape[:-1], D)

    # 1) default path (single-pass fast path at these shapes)
    out = jax.block_until_ready(mlp_forward(x, w1, b1, w2, b2))
    assert out.shape == (B, P, D)
    assert jnp.allclose(out, ref_mlp(x), atol=1e-3, rtol=1e-3), "single-pass mismatch"

    # 2) forced hidden-axis reduction path (f32 output accumulates into o_ref)
    out_r = jax.block_until_ready(mlp_forward(x, w1, b1, w2, b2, th=128))
    assert jnp.allclose(out_r, ref_mlp(x), atol=1e-3, rtol=1e-3), "reduce-f32 mismatch"

    # 3) ragged token count -> wrapper pads M to the row tile and slices back
    x_ragged = x[:, :7, :]
    out_g = jax.block_until_ready(mlp_forward(x_ragged, w1, b1, w2, b2))
    assert jnp.allclose(out_g, ref_mlp(x_ragged), atol=1e-3, rtol=1e-3), "ragged mismatch"

    # 4) bf16 MXU-operand perf path (v5e/v6e); f32 bias/GELU/accumulate, f32 out
    out_bf = jax.block_until_ready(
        mlp_forward(x, w1, b1, w2, b2, matmul_dtype=jnp.bfloat16))
    assert jnp.allclose(out_bf, ref_mlp(x), atol=5e-2, rtol=5e-2), "bf16 mismatch"

    # 5) bf16 input + forced reduction -> exercises the scratch-accumulator kernel
    out_acc = jax.block_until_ready(
        mlp_forward(x.astype(jnp.bfloat16), w1, b1, w2, b2,
                    matmul_dtype=jnp.bfloat16, th=128))
    assert jnp.allclose(out_acc.astype(jnp.float32), ref_mlp(x),
                        atol=6e-2, rtol=6e-2), "reduce-acc mismatch"

    print("KERNEL_OK")
</pallas_src>

<mosaic_0001>
module attributes {stable_mosaic.version = 11 : i64} {
  func.func @_mlp_kernel_single(%arg0: i32, %arg1: memref<8x128xf32, #tpu.memory_space<vmem>>, %arg2: memref<128x512xf32, #tpu.memory_space<vmem>>, %arg3: memref<1x512xf32, #tpu.memory_space<vmem>>, %arg4: memref<512x128xf32, #tpu.memory_space<vmem>>, %arg5: memref<1x128xf32, #tpu.memory_space<vmem>>, %arg6: memref<8x128xf32, #tpu.memory_space<vmem>>) attributes {dimension_semantics = [#tpu.dimension_semantics<parallel>], iteration_bounds = array<i64: 2>, scalar_prefetch = 0 : i64, scratch_operands = 0 : i64, tpu.core_type = #tpu.core_type<tc>, window_params = [{transform_indices = @transform_0, window_bounds = array<i64: 8, 128>}, {pipeline_mode = #tpu.pipeline_mode<synchronous>, transform_indices = @transform_1, window_bounds = array<i64: 128, 512>}, {pipeline_mode = #tpu.pipeline_mode<synchronous>, transform_indices = @transform_2, window_bounds = array<i64: 1, 512>}, {pipeline_mode = #tpu.pipeline_mode<synchronous>, transform_indices = @transform_3, window_bounds = array<i64: 512, 128>}, {pipeline_mode = #tpu.pipeline_mode<synchronous>, transform_indices = @transform_4, window_bounds = array<i64: 1, 128>}, {transform_indices = @transform_5, window_bounds = array<i64: 8, 128>}]} {
    %c0 = arith.constant 0 : index
    %c0_0 = arith.constant 0 : index
    %0 = vector.load %arg1[%c0, %c0_0] : memref<8x128xf32, #tpu.memory_space<vmem>>, vector<8x128xf32>
    %c0_1 = arith.constant 0 : index
    %c0_2 = arith.constant 0 : index
    %1 = vector.load %arg2[%c0_1, %c0_2] : memref<128x512xf32, #tpu.memory_space<vmem>>, vector<128x512xf32>
    %cst = arith.constant dense<0.000000e+00> : vector<8x512xf32>
    %2 = tpu.matmul %0, %1, %cst {dimension_numbers = #tpu.dot_dimension_numbers<[1], [0], [0], [1], [0, 0, 1, 1], [], []>} : vector<8x128xf32>, vector<128x512xf32>, vector<8x512xf32> -> vector<8x512xf32>
    %c0_3 = arith.constant 0 : index
    %c0_4 = arith.constant 0 : index
    %3 = vector.load %arg3[%c0_3, %c0_4] : memref<1x512xf32, #tpu.memory_space<vmem>>, vector<1x512xf32>
    %4 = vector.broadcast %3 : vector<1x512xf32> to vector<8x512xf32>
    %5 = arith.addf %2, %4 : vector<8x512xf32>
    %cst_5 = arith.constant 5.000000e-01 : f32
    %6 = vector.broadcast %cst_5 : f32 to vector<8x512xf32>
    %7 = arith.mulf %6, %5 : vector<8x512xf32>
    %cst_6 = arith.constant 4.471500e-02 : f32
    %8 = vector.broadcast %cst_6 : f32 to vector<8x512xf32>
    %9 = arith.mulf %8, %5 : vector<8x512xf32>
    %10 = arith.mulf %9, %5 : vector<8x512xf32>
    %11 = arith.mulf %10, %5 : vector<8x512xf32>
    %12 = arith.addf %5, %11 : vector<8x512xf32>
    %cst_7 = arith.constant 0.797884583 : f32
    %13 = vector.broadcast %cst_7 : f32 to vector<8x512xf32>
    %14 = arith.mulf %13, %12 : vector<8x512xf32>
    %15 = math.tanh %14 : vector<8x512xf32>
    %cst_8 = arith.constant 1.000000e+00 : f32
    %16 = vector.broadcast %cst_8 : f32 to vector<8x512xf32>
    %17 = arith.addf %16, %15 : vector<8x512xf32>
    %18 = arith.mulf %7, %17 : vector<8x512xf32>
    %c0_9 = arith.constant 0 : index
    %c0_10 = arith.constant 0 : index
    %19 = vector.load %arg4[%c0_9, %c0_10] : memref<512x128xf32, #tpu.memory_space<vmem>>, vector<512x128xf32>
    %cst_11 = arith.constant dense<0.000000e+00> : vector<8x128xf32>
    %20 = tpu.matmul %18, %19, %cst_11 {dimension_numbers = #tpu.dot_dimension_numbers<[1], [0], [0], [1], [0, 0, 1, 1], [], []>} : vector<8x512xf32>, vector<512x128xf32>, vector<8x128xf32> -> vector<8x128xf32>
    %c0_12 = arith.constant 0 : index
    %c0_13 = arith.constant 0 : index
    %21 = vector.load %arg5[%c0_12, %c0_13] : memref<1x128xf32, #tpu.memory_space<vmem>>, vector<1x128xf32>
    %22 = vector.broadcast %21 : vector<1x128xf32> to vector<8x128xf32>
    %23 = arith.addf %20, %22 : vector<8x128xf32>
    %c0_14 = arith.constant 0 : index
    %c0_15 = arith.constant 0 : index
    %24 = vector.load %arg6[%c0_14, %c0_15] : memref<8x128xf32, #tpu.memory_space<vmem>>, vector<8x128xf32>
    tpu.vector_store %arg6[%c0_14, %c0_15], %23 {strides = array<i32>} : memref<8x128xf32, #tpu.memory_space<vmem>>, vector<8x128xf32>,
    return
  }
  func.func @transform_0(%arg0: i32) -> (i32, i32) {
    %c0_i32 = arith.constant 0 : i32
    %c0_i32_0 = arith.constant 0 : i32
    return %arg0, %c0_i32 : i32, i32
  }
  func.func @transform_1(%arg0: i32) -> (i32, i32) {
    %c0_i32 = arith.constant 0 : i32
    %c0_i32_0 = arith.constant 0 : i32
    %c0_i32_1 = arith.constant 0 : i32
    return %c0_i32, %c0_i32_0 : i32, i32
  }
  func.func @transform_2(%arg0: i32) -> (i32, i32) {
    %c0_i32 = arith.constant 0 : i32
    %c0_i32_0 = arith.constant 0 : i32
    %c0_i32_1 = arith.constant 0 : i32
    return %c0_i32, %c0_i32_0 : i32, i32
  }
  func.func @transform_3(%arg0: i32) -> (i32, i32) {
    %c0_i32 = arith.constant 0 : i32
    %c0_i32_0 = arith.constant 0 : i32
    %c0_i32_1 = arith.constant 0 : i32
    return %c0_i32, %c0_i32_0 : i32, i32
  }
  func.func @transform_4(%arg0: i32) -> (i32, i32) {
    %c0_i32 = arith.constant 0 : i32
    %c0_i32_0 = arith.constant 0 : i32
    %c0_i32_1 = arith.constant 0 : i32
    return %c0_i32, %c0_i32_0 : i32, i32
  }
  func.func @transform_5(%arg0: i32) -> (i32, i32) {
    %c0_i32 = arith.constant 0 : i32
    %c0_i32_0 = arith.constant 0 : i32
    return %arg0, %c0_i32 : i32, i32
  }
}

</mosaic_0001>

<llo_original>
// kernel: tpu_custom_call.1
$region0: #{tpu_custom_call.1}
  #allocation0 [shape = 'u32[]', space=smem, size = 0x4, offset = 0x4, fixed_abs, tag = 'smem constant byte address 0x4 - core index']
  #allocation1 [shape = 'u32[144,128]{1,0:T(1,128)}', space=vmem, size = 0x12000, scoped, tag = 'internal scratch']
  %s0 = inlined_call_operand.hbm [shape: f32[16,128], index: 0, kind: input, shape index: {}]
  %s1 = inlined_call_operand.hbm [shape: f32[128,512], index: 1, kind: input, shape index: {}]
  %s2 = inlined_call_operand.vmem [shape: f32[1,512], index: 2, kind: input, shape index: {}]
  %s3 = inlined_call_operand.hbm [shape: f32[512,128], index: 3, kind: input, shape index: {}]
  %s4 = inlined_call_operand.vmem [shape: f32[1,128], index: 4, kind: input, shape index: {}]
  %s5 = inlined_call_operand.hbm [shape: f32[16,128], index: 5, kind: output, shape index: {}]
  %s6 = sld [smem:[#allocation0]]
  $region65: #{tpu_custom_call.1} parent=0
    _
  %s8 = ssub.s32 1, %s6
  %s9 = scalar_select 0, %s8, %s6
  $region1: #{tpu_custom_call.1} parent=0
    #allocation2 [shape = 'u8[8192]{0}', space=vmem, size = 0x2000, scoped, tag = 'input window, operand 0']
    #allocation3 [shape = 's32[2]{0}', space=sflag, size = 0x8, scoped, tag = 'scoped memory for tpu_custom_call.1']
    #allocation4 [shape = 's32[2]{0}', space=sflag, size = 0x8, scoped, tag = 'scoped memory for tpu_custom_call.1']
    #allocation5 [shape = 'u8[262144]{0}', space=vmem, size = 0x40000, scoped, tag = 'input window, operand 1, single buffered']
    #allocation6 [shape = 's32[1]{0}', space=sflag, size = 0x4, scoped, tag = 'scoped memory for tpu_custom_call.1']
    #allocation7 [shape = 'u8[262144]{0}', space=vmem, size = 0x40000, scoped, tag = 'input window, operand 3, single buffered']
    #allocation8 [shape = 'u8[8192]{0}', space=vmem, size = 0x2000, scoped, tag = 'output window, operand 0']
    %10 = vsyncpa [#allocation3], 0
    %s11 = scalar_lea.sflag [#allocation3], 1
    %12 = vsyncpa %s11, 0
    %13 = vsyncpa [#allocation6], 0
    %14 = vsyncpa [#allocation4], 0
    %s15 = scalar_lea.sflag [#allocation4], 1
    %16 = vsyncpa %s15, 0
    loop: start=0, step=1, limit=4
    $region2: #{tpu_custom_call.1} parent=1 // loop_pre_header
      _
    $region3: #{tpu_custom_call.1} parent=1 // loop_header
      %s18 = sphi 0, %s22
      %p19 = scmp.ge.s32.totalorder %s18, 4
      %s28 = sphi 0, %s30
      %s31 = sphi 0, %s28
      %s32 = sphi 0, %s31
      %s48 = sphi 0, %s32
      %s52 = sphi 0, %s52
      %s54 = sphi 0, %s52
      %s55 = sphi 0, %s54
      %s69 = sphi 0, %s55
      %s73 = sphi 0, %s73
      %s75 = sphi 0, %s73
      %s76 = sphi 0, %s75
      %s90 = sphi 0, %s76
      %s94 = sphi 0, %s94
      %s96 = sphi 0, %s94
      %s97 = sphi 0, %s96
      %s111 = sphi 0, %s97
      %s115 = sphi 0, %s115
      %s117 = sphi 0, %s115
      %s118 = sphi 0, %s117
      %s132 = sphi 0, %s118
      %s138 = sphi 0, %s140
      %s141 = sphi 0, %s138
      %s142 = sphi 0, %s141
      %s158 = sphi 0, %s142
    $region4: #{tpu_custom_call.1} parent=1 // loop_header_branch
      %21 = sbr.rel (%p19) target = $region8
    $region5: #{tpu_custom_call.1} parent=1 // loop_body
      %s23 = ssub.s32 %s18, 1
      %s24 = ssub.s32 %s18, 2
      %s25 = sadd.s32 %s18, 1
      %s26 = ssub.s32 %s18, %s25
      %p27 = scmp.eq.s32.totalorder %s26, 0
      %s29 = sadd.s32 %s28, 1
      %s30 = scalar_select %p27, %s28, %s29
      %p33 = pneg %p27
      %p34 = scmp.eq.s32.totalorder %s18, 1
      %p35 = por %p33, %p34
      %p36 = scmp.ne.s32.totalorder %s28, %s31
      %p37 = scmp.eq.s32.totalorder %s18, 0
      %p38 = por %p36, %p37
      %p39 = scmp.ne.s32.totalorder %s28, %s31
      %p40 = scmp.eq.s32.totalorder %s23, 1
      %p41 = por %p39, %p40
      %p42 = scmp.ne.s32.totalorder %s31, %s32
      %p43 = scmp.eq.s32.totalorder %s23, 0
      %p44 = por %p42, %p43
      %p45 = scmp.ne.s32.totalorder %s31, %s32
      %p46 = scmp.eq.s32.totalorder %s24, 1
      %p47 = por %p45, %p46
      %p49 = scmp.ne.s32.totalorder %s32, %s48
      %p50 = scmp.eq.s32.totalorder %s24, 0
      %p51 = por %p49, %p50
      %s53 = sadd.s32 %s52, 1
      %p56 = scmp.eq.s32.totalorder %s18, 1
      %p57 = scmp.ne.s32.totalorder %s52, %s54
      %p58 = scmp.eq.s32.totalorder %s18, 0
      %p59 = por %p57, %p58
      %p60 = scmp.ne.s32.totalorder %s52, %s54
      %p61 = scmp.eq.s32.totalorder %s23, 1
      %p62 = por %p60, %p61
      %p63 = scmp.ne.s32.totalorder %s54, %s55
      %p64 = scmp.eq.s32.totalorder %s23, 0
      %p65 = por %p63, %p64
      %p66 = scmp.ne.s32.totalorder %s54, %s55
      %p67 = scmp.eq.s32.totalorder %s24, 1
      %p68 = por %p66, %p67
      %p70 = scmp.ne.s32.totalorder %s55, %s69
      %p71 = scmp.eq.s32.totalorder %s24, 0
      %p72 = por %p70, %p71
      %s74 = sadd.s32 %s73, 1
      %p77 = scmp.eq.s32.totalorder %s18, 1
      %p78 = scmp.ne.s32.totalorder %s73, %s75
      %p79 = scmp.eq.s32.totalorder %s18, 0
      %p80 = por %p78, %p79
      %p81 = scmp.ne.s32.totalorder %s73, %s75
      %p82 = scmp.eq.s32.totalorder %s23, 1
      %p83 = por %p81, %p82
      %p84 = scmp.ne.s32.totalorder %s75, %s76
      %p85 = scmp.eq.s32.totalorder %s23, 0
      %p86 = por %p84, %p85
      %p87 = scmp.ne.s32.totalorder %s75, %s76
      %p88 = scmp.eq.s32.totalorder %s24, 1
      %p89 = por %p87, %p88
      %p91 = scmp.ne.s32.totalorder %s76, %s90
      %p92 = scmp.eq.s32.totalorder %s24, 0
      %p93 = por %p91, %p92
      %s95 = sadd.s32 %s94, 1
      %p98 = scmp.eq.s32.totalorder %s18, 1
      %p99 = scmp.ne.s32.totalorder %s94, %s96
      %p100 = scmp.eq.s32.totalorder %s18, 0
      %p101 = por %p99, %p100
      %p102 = scmp.ne.s32.totalorder %s94, %s96
      %p103 = scmp.eq.s32.totalorder %s23, 1
      %p104 = por %p102, %p103
      %p105 = scmp.ne.s32.totalorder %s96, %s97
      %p106 = scmp.eq.s32.totalorder %s23, 0
      %p107 = por %p105, %p106
      %p108 = scmp.ne.s32.totalorder %s96, %s97
      %p109 = scmp.eq.s32.totalorder %s24, 1
      %p110 = por %p108, %p109
      %p112 = scmp.ne.s32.totalorder %s97, %s111
      %p113 = scmp.eq.s32.totalorder %s24, 0
      %p114 = por %p112, %p113
      %s116 = sadd.s32 %s115, 1
      %p119 = scmp.eq.s32.totalorder %s18, 1
      %p120 = scmp.ne.s32.totalorder %s115, %s117
      %p121 = scmp.eq.s32.totalorder %s18, 0
      %p122 = por %p120, %p121
      %p123 = scmp.ne.s32.totalorder %s115, %s117
      %p124 = scmp.eq.s32.totalorder %s23, 1
      %p125 = por %p123, %p124
      %p126 = scmp.ne.s32.totalorder %s117, %s118
      %p127 = scmp.eq.s32.totalorder %s23, 0
      %p128 = por %p126, %p127
      %p129 = scmp.ne.s32.totalorder %s117, %s118
      %p130 = scmp.eq.s32.totalorder %s24, 1
      %p131 = por %p129, %p130
      %p133 = scmp.ne.s32.totalorder %s118, %s132
      %p134 = scmp.eq.s32.totalorder %s24, 0
      %p135 = por %p133, %p134
      %s136 = ssub.s32 %s18, %s25
      %p137 = scmp.eq.s32.totalorder %s136, 0
      %s139 = sadd.s32 %s138, 1
      %s140 = scalar_select %p137, %s138, %s139
      %p143 = pneg %p137
      %p144 = scmp.eq.s32.totalorder %s18, 1
      %p145 = por %p143, %p144
      %p146 = scmp.ne.s32.totalorder %s138, %s141
      %p147 = scmp.eq.s32.totalorder %s18, 0
      %p148 = por %p146, %p147
      %p149 = scmp.ne.s32.totalorder %s138, %s141
      %p150 = scmp.eq.s32.totalorder %s23, 1
      %p151 = por %p149, %p150
      %p152 = scmp.ne.s32.totalorder %s141, %s142
      %p153 = scmp.eq.s32.totalorder %s23, 0
      %p154 = por %p152, %p153
      %p155 = scmp.ne.s32.totalorder %s141, %s142
      %p156 = scmp.eq.s32.totalorder %s24, 1
      %p157 = por %p155, %p156
      %p159 = scmp.ne.s32.totalorder %s142, %s158
      %p160 = scmp.eq.s32.totalorder %s24, 0
      %p161 = por %p159, %p160
      %p162 = scmp.le.s32.totalorder 1, %s18
      %p163 = scmp.lt.s32.totalorder %s18, 3
      %p164 = pnand %p162, %p163
      %p165 = pneg %p164
      // Predicated region
      $region9: #{tpu_custom_call.1} parent=5 // pred_check
        _
      $region10: #{tpu_custom_call.1} parent=5 // pred_check_branch
        %167 = sbr.rel (%p164) target = $region12
      $region11: #{tpu_custom_call.1} parent=5 // pred_region
        %s168 = ssub.s32 %s18, 1
        // Predicated region
        $region13: #{tpu_custom_call.1} parent=11 // pred_check
          %p169 = pneg %p65
        $region14: #{tpu_custom_call.1} parent=11 // pred_check_branch
          %171 = sbr.rel (%p169) target = $region16
        $region15: #{tpu_custom_call.1} parent=11 // pred_region
          %s173 = ssub.s32 8192, 8192
          %174 = vsyncadd [#allocation6], %s173
          %s175 = sshll.u32 [#allocation5], 4
          %s176 = int_to_ptr.vmem [resolvable:$true] %s175
          %181 = dma.hbm_to_vmem [thread:$0]  %s1, 8192, %s176, [#allocation6], 512, 512, 32
        $region16: #{tpu_custom_call.1} parent=11 // pred_fallthru
          _
        // Predicated region
        $region17: #{tpu_custom_call.1} parent=11 // pred_check
          %p182 = pneg %p86
        $region18: #{tpu_custom_call.1} parent=11 // pred_check_branch
          %184 = sbr.rel (%p182) target = $region20
        $region19: #{tpu_custom_call.1} parent=11 // pred_region
          _
        $region20: #{tpu_custom_call.1} parent=11 // pred_fallthru
          _
        // Predicated region
        $region21: #{tpu_custom_call.1} parent=11 // pred_check
          %p185 = pneg %p107
        $region22: #{tpu_custom_call.1} parent=11 // pred_check_branch
          %187 = sbr.rel (%p185) target = $region24
        $region23: #{tpu_custom_call.1} parent=11 // pred_region
          %s189 = ssub.s32 8192, 8192
          %190 = vsyncadd [#allocation6], %s189
          %s191 = sshll.u32 [#allocation7], 4
          %s192 = int_to_ptr.vmem [resolvable:$true] %s191
          %197 = dma.hbm_to_vmem [thread:$0]  %s3, 8192, %s192, [#allocation6], 128, 128, 8
        $region24: #{tpu_custom_call.1} parent=11 // pred_fallthru
          _
        // Predicated region
        $region25: #{tpu_custom_call.1} parent=11 // pred_check
          %p198 = pneg %p128
        $region26: #{tpu_custom_call.1} parent=11 // pred_check_branch
          %200 = sbr.rel (%p198) target = $region28
        $region27: #{tpu_custom_call.1} parent=11 // pred_region
          _
        $region28: #{tpu_custom_call.1} parent=11 // pred_fallthru
          _
      $region12: #{tpu_custom_call.1} parent=5 // pred_fallthru
        _
      %p201 = scmp.lt.s32.totalorder %s18, 2
      // Predicated region
      $region29: #{tpu_custom_call.1} parent=5 // pred_check
        %p202 = pneg %p201
      $region30: #{tpu_custom_call.1} parent=5 // pred_check_branch
        %204 = sbr.rel (%p202) target = $region32
      $region31: #{tpu_custom_call.1} parent=5 // pred_region
        // Predicated region
        $region33: #{tpu_custom_call.1} parent=31 // pred_check
          %p205 = pneg %p38
        $region34: #{tpu_custom_call.1} parent=31 // pred_check_branch
          %207 = sbr.rel (%p205) target = $region36
        $region35: #{tpu_custom_call.1} parent=31 // pred_region
          %s208 = sand.u32 %s28, 1
          %s209 = scalar_lea.sflag [#allocation3], %s208
          %s210 = sand.u32 %s28, 1
          %s211 = smul.addr %s210, 8
          %s212 = scalar_lea.vmem [#allocation2], %s211
          %s214 = ssub.s32 128, 128
          %215 = vsyncadd %s209, %s214
          %s216 = smul.addr %s18, 128
          %s217 = scalar_lea.hbm %s0, %s216
          %s219 = sshll.u32 %s212, 4
          %s220 = int_to_ptr.vmem [resolvable:$true] %s219
          %222 = dma.hbm_to_vmem [thread:$0]  %s217, 128, %s220, %s209
        $region36: #{tpu_custom_call.1} parent=31 // pred_fallthru
          _
      $region32: #{tpu_custom_call.1} parent=5 // pred_fallthru
        _
      %p223 = scmp.le.s32.totalorder 1, %s18
      %p224 = scmp.lt.s32.totalorder %s18, 3
      %p225 = pnand %p223, %p224
      %p226 = pneg %p225
      // Predicated region
      $region37: #{tpu_custom_call.1} parent=5 // pred_check
        _
      $region38: #{tpu_custom_call.1} parent=5 // pred_check_branch
        %228 = sbr.rel (%p225) target = $region40
      $region39: #{tpu_custom_call.1} parent=5 // pred_region
        %s229 = ssub.s32 %s18, 1
        %s230 = sand.u32 %s31, 1
        %s231 = scalar_lea.sflag [#allocation3], %s230
        %s232 = sand.u32 %s31, 1
        %s233 = smul.addr %s232, 8
        %s234 = scalar_lea.vmem [#allocation2], %s233
        // Predicated region
        $region41: #{tpu_custom_call.1} parent=39 // pred_check
          %p235 = pneg %p44
        $region42: #{tpu_custom_call.1} parent=39 // pred_check_branch
          %237 = sbr.rel (%p235) target = $region44
        $region43: #{tpu_custom_call.1} parent=39 // pred_region
          %238 = dma.done %s231, 128
        $region44: #{tpu_custom_call.1} parent=39 // pred_fallthru
          _
        // Predicated region
        $region45: #{tpu_custom_call.1} parent=39 // pred_check
          %p239 = pneg %p65
        $region46: #{tpu_custom_call.1} parent=39 // pred_check_branch
          %241 = sbr.rel (%p239) target = $region48
        $region47: #{tpu_custom_call.1} parent=39 // pred_region
          %242 = dma.done [#allocation6], 8192
        $region48: #{tpu_custom_call.1} parent=39 // pred_fallthru
          _
        // Predicated region
        $region49: #{tpu_custom_call.1} parent=39 // pred_check
          %p243 = pneg %p107
        $region50: #{tpu_custom_call.1} parent=39 // pred_check_branch
          %245 = sbr.rel (%p243) target = $region52
        $region51: #{tpu_custom_call.1} parent=39 // pred_region
          %246 = dma.done [#allocation6], 8192
        $region52: #{tpu_custom_call.1} parent=39 // pred_fallthru
          _
        %s247 = sand.u32 %s31, 1
        %s248 = scalar_lea.sflag [#allocation3], %s247
        %s249 = sand.u32 %s31, 1
        %s250 = smul.addr %s249, 8
        %s251 = scalar_lea.vmem [#allocation2], %s250
        %p252 = pneg %p44
        %p253 = pneg %p41
        %p254 = pneg %p65
        %p255 = pneg %p62
        %p256 = pneg %p86
        %p257 = pneg %p83
        %p258 = pneg %p107
        %p259 = pneg %p104
        %p260 = pneg %p128
        %p261 = pneg %p125
        %p262 = pneg %p154
        %p263 = pneg %p151
        %s264 = sand.u32 %s141, 1
        %s265 = scalar_lea.sflag [#allocation4], %s264
        %s266 = sand.u32 %s141, 1
        %s267 = smul.addr %s266, 8
        %s268 = scalar_lea.vmem [#allocation8], %s267
        %v269 = vld [vmem:[%s234] sm:$0xff]
        %v270 = vld [vmem:[#allocation5] sm:$0xff]
        %v271 = vld [vmem:[#allocation5 + $0x8] sm:$0xff]
        %v272 = vld [vmem:[#allocation5 + $0x10] sm:$0xff]
        %v273 = vld [vmem:[#allocation5 + $0x18] sm:$0xff]
        %v274 = vld [vmem:[#allocation5 + $0x20] sm:$0xff]
        %v275 = vld [vmem:[#allocation5 + $0x28] sm:$0xff]
        %v276 = vld [vmem:[#allocation5 + $0x30] sm:$0xff]
        %v277 = vld [vmem:[#allocation5 + $0x38] sm:$0xff]
        %v278 = vld [vmem:[#allocation5 + $0x40] sm:$0xff]
        %v279 = vld [vmem:[#allocation5 + $0x48] sm:$0xff]
        %v280 = vld [vmem:[#allocation5 + $0x50] sm:$0xff]
        %v281 = vld [vmem:[#allocation5 + $0x58] sm:$0xff]
        %v282 = vld [vmem:[#allocation5 + $0x60] sm:$0xff]
        %v283 = vld [vmem:[#allocation5 + $0x68] sm:$0xff]
        %v284 = vld [vmem:[#allocation5 + $0x70] sm:$0xff]
        %v285 = vld [vmem:[#allocation5 + $0x78] sm:$0xff]
        %v286 = vld [vmem:[#allocation5 + $0x80] sm:$0xff]
        %v287 = vld [vmem:[#allocation5 + $0x88] sm:$0xff]
        %v288 = vld [vmem:[#allocation5 + $0x90] sm:$0xff]
        %v289 = vld [vmem:[#allocation5 + $0x98] sm:$0xff]
        %v290 = vld [vmem:[#allocation5 + $0xa0] sm:$0xff]
        %v291 = vld [vmem:[#allocation5 + $0xa8] sm:$0xff]
        %v292 = vld [vmem:[#allocation5 + $0xb0] sm:$0xff]
        %v293 = vld [vmem:[#allocation5 + $0xb8] sm:$0xff]
        %v294 = vld [vmem:[#allocation5 + $0xc0] sm:$0xff]
        %v295 = vld [vmem:[#allocation5 + $0xc8] sm:$0xff]
        %v296 = vld [vmem:[#allocation5 + $0xd0] sm:$0xff]
        %v297 = vld [vmem:[#allocation5 + $0xd8] sm:$0xff]
        %v298 = vld [vmem:[#allocation5 + $0xe0] sm:$0xff]
        %v299 = vld [vmem:[#allocation5 + $0xe8] sm:$0xff]
        %v300 = vld [vmem:[#allocation5 + $0xf0] sm:$0xff]
        %v301 = vld [vmem:[#allocation5 + $0xf8] sm:$0xff]
        %v302 = vld [vmem:[#allocation5 + $0x100] sm:$0xff]
        %v303 = vld [vmem:[#allocation5 + $0x108] sm:$0xff]
        %v304 = vld [vmem:[#allocation5 + $0x110] sm:$0xff]
        %v305 = vld [vmem:[#allocation5 + $0x118] sm:$0xff]
        %v306 = vld [vmem:[#allocation5 + $0x120] sm:$0xff]
        %v307 = vld [vmem:[#allocation5 + $0x128] sm:$0xff]
        %v308 = vld [vmem:[#allocation5 + $0x130] sm:$0xff]
        %v309 = vld [vmem:[#allocation5 + $0x138] sm:$0xff]
        %v310 = vld [vmem:[#allocation5 + $0x140] sm:$0xff]
        %v311 = vld [vmem:[#allocation5 + $0x148] sm:$0xff]
        %v312 = vld [vmem:[#allocation5 + $0x150] sm:$0xff]
        %v313 = vld [vmem:[#allocation5 + $0x158] sm:$0xff]
        %v314 = vld [vmem:[#allocation5 + $0x160] sm:$0xff]
        %v315 = vld [vmem:[#allocation5 + $0x168] sm:$0xff]
        %v316 = vld [vmem:[#allocation5 + $0x170] sm:$0xff]
        %v317 = vld [vmem:[#allocation5 + $0x178] sm:$0xff]
        %v318 = vld [vmem:[#allocation5 + $0x180] sm:$0xff]
        %v319 = vld [vmem:[#allocation5 + $0x188] sm:$0xff]
        %v320 = vld [vmem:[#allocation5 + $0x190] sm:$0xff]
        %v321 = vld [vmem:[#allocation5 + $0x198] sm:$0xff]
        %v322 = vld [vmem:[#allocation5 + $0x1a0] sm:$0xff]
        %v323 = vld [vmem:[#allocation5 + $0x1a8] sm:$0xff]
        %v324 = vld [vmem:[#allocation5 + $0x1b0] sm:$0xff]
        %v325 = vld [vmem:[#allocation5 + $0x1b8] sm:$0xff]
        %v326 = vld [vmem:[#allocation5 + $0x1c0] sm:$0xff]
        %v327 = vld [vmem:[#allocation5 + $0x1c8] sm:$0xff]
        %v328 = vld [vmem:[#allocation5 + $0x1d0] sm:$0xff]
        %v329 = vld [vmem:[#allocation5 + $0x1d8] sm:$0xff]
        %v330 = vld [vmem:[#allocation5 + $0x1e0] sm:$0xff]
        %v331 = vld [vmem:[#allocation5 + $0x1e8] sm:$0xff]
        %v332 = vld [vmem:[#allocation5 + $0x1f0] sm:$0xff]
        %v333 = vld [vmem:[#allocation5 + $0x1f8] sm:$0xff]
        %v334 = vld [vmem:[%s2] sm:$0xf]
        %v336 = vlaneseq
        %v337 = vshrl.u32 %v336, 7
        %v338 = vsub.s32 0, %v337
        %v339 = vrot.slane %v334, %v338
        %v340 = vlaneseq
        %v341 = vshrl.u32 %v340, 7
        %v342 = vsub.s32 1, %v341
        %v343 = vrot.slane %v334, %v342
        %v344 = vlaneseq
        %v345 = vshrl.u32 %v344, 7
        %v346 = vsub.s32 2, %v345
        %v347 = vrot.slane %v334, %v346
        %v348 = vlaneseq
        %v349 = vshrl.u32 %v348, 7
        %v350 = vsub.s32 3, %v349
        %v351 = vrot.slane %v334, %v350
        %356 = vmatprep.subr.mxu0 %v271
        %357 = vmatpush1.msra.mxu0 %v270
        %358 = vmatprep.subr.mxu0 %v275
        %359 = vmatpush1.msra.mxu0 %v274
        %360 = vmatprep.subr.mxu0 %v279
        %361 = vmatpush1.msra.mxu0 %v278
        %362 = vmatprep.subr.mxu0 %v283
        %363 = vmatpush1.msra.mxu0 %v282
        %364 = vmatprep.subr.mxu0 %v287
        %365 = vmatpush1.msra.mxu0 %v286
        %366 = vmatprep.subr.mxu0 %v291
        %367 = vmatpush1.msra.mxu0 %v290
        %368 = vmatprep.subr.mxu0 %v295
        %369 = vmatpush1.msra.mxu0 %v294
        %370 = vmatprep.subr.mxu0 %v299
        %371 = vmatpush1.msra.mxu0 %v298
        %372 = vmatprep.subr.mxu0 %v303
        %373 = vmatpush1.msra.mxu0 %v302
        %374 = vmatprep.subr.mxu0 %v307
        %375 = vmatpush1.msra.mxu0 %v306
        %376 = vmatprep.subr.mxu0 %v311
        %377 = vmatpush1.msra.mxu0 %v310
        %378 = vmatprep.subr.mxu0 %v315
        %379 = vmatpush1.msra.mxu0 %v314
        %380 = vmatprep.subr.mxu0 %v319
        %381 = vmatpush1.msra.mxu0 %v318
        %382 = vmatprep.subr.mxu0 %v323
        %383 = vmatpush1.msra.mxu0 %v322
        %384 = vmatprep.subr.mxu0 %v327
        %385 = vmatpush1.msra.mxu0 %v326
        %386 = vmatprep.subr.mxu0 %v331
        %387 = vmatpush1.msra.mxu0 %v330
        %388 = vmatprep.subr.mxu0 0.0
        %389 = vmatpush1.msra.mxu0 0.0
        %390 = vmatprep.subr.mxu0 0.0
        %391 = vmatpush1.msra.mxu0 0.0
        %392 = vmatprep.subr.mxu0 0.0
        %393 = vmatpush1.msra.mxu0 0.0
        %394 = vmatprep.subr.mxu0 0.0
        %395 = vmatpush1.msra.mxu0 0.0
        %396 = vmatprep.subr.mxu0 0.0
        %397 = vmatpush1.msra.mxu0 0.0
        %398 = vmatprep.subr.mxu0 0.0
        %399 = vmatpush1.msra.mxu0 0.0
        %400 = vmatprep.subr.mxu0 0.0
        %401 = vmatpush1.msra.mxu0 0.0
        %402 = vmatprep.subr.mxu0 0.0
        %403 = vmatpush1.msra.mxu0 0.0
        %404 = vmatprep.subr.mxu0 0.0
        %405 = vmatpush1.msra.mxu0 0.0
        %406 = vmatprep.subr.mxu0 0.0
        %407 = vmatpush1.msra.mxu0 0.0
        %408 = vmatprep.subr.mxu0 0.0
        %409 = vmatpush1.msra.mxu0 0.0
        %410 = vmatprep.subr.mxu0 0.0
        %411 = vmatpush1.msra.mxu0 0.0
        %412 = vmatprep.subr.mxu0 0.0
        %413 = vmatpush1.msra.mxu0 0.0
        %414 = vmatprep.subr.mxu0 0.0
        %415 = vmatpush1.msra.mxu0 0.0
        %416 = vmatprep.subr.mxu0 0.0
        %417 = vmatpush1.msra.mxu0 0.0
        %418 = vmatprep.subr.mxu0 0.0
        %419 = vmatpush1.msra.mxu0 0.0
        %420 = vmatprep.mubr.f32.mxu0 0.0
        %421 = vmatmul.mubr.f32.gmra.mrb[0].mxu0 %v269
        %v422 = vpop.f32.mrb[0].mxu0
        %v423 = vadd.f32 %v339, %v422
        %v424 = vpop.f32.mrb[0].mxu0
        %v425 = vadd.f32 %v343, %v424
        %426 = vdwg.mxu0
        %427 = vmatprep.subr.mxu0 %v273
        %428 = vmatpush1.msra.mxu0 %v272
        %429 = vmatprep.subr.mxu0 %v277
        %430 = vmatpush1.msra.mxu0 %v276
        %431 = vmatprep.subr.mxu0 %v281
        %432 = vmatpush1.msra.mxu0 %v280
        %433 = vmatprep.subr.mxu0 %v285
        %434 = vmatpush1.msra.mxu0 %v284
        %435 = vmatprep.subr.mxu0 %v289
        %436 = vmatpush1.msra.mxu0 %v288
        %437 = vmatprep.subr.mxu0 %v293
        %438 = vmatpush1.msra.mxu0 %v292
        %439 = vmatprep.subr.mxu0 %v297
        %440 = vmatpush1.msra.mxu0 %v296
        %441 = vmatprep.subr.mxu0 %v301
        %442 = vmatpush1.msra.mxu0 %v300
        %443 = vmatprep.subr.mxu0 %v305
        %444 = vmatpush1.msra.mxu0 %v304
        %445 = vmatprep.subr.mxu0 %v309
        %446 = vmatpush1.msra.mxu0 %v308
        %447 = vmatprep.subr.mxu0 %v313
        %448 = vmatpush1.msra.mxu0 %v312
        %449 = vmatprep.subr.mxu0 %v317
        %450 = vmatpush1.msra.mxu0 %v316
        %451 = vmatprep.subr.mxu0 %v321
        %452 = vmatpush1.msra.mxu0 %v320
        %453 = vmatprep.subr.mxu0 %v325
        %454 = vmatpush1.msra.mxu0 %v324
        %455 = vmatprep.subr.mxu0 %v329
        %456 = vmatpush1.msra.mxu0 %v328
        %457 = vmatprep.subr.mxu0 %v333
        %458 = vmatpush1.msra.mxu0 %v332
        %459 = vmatprep.subr.mxu0 0.0
        %460 = vmatpush1.msra.mxu0 0.0
        %461 = vmatprep.subr.mxu0 0.0
        %462 = vmatpush1.msra.mxu0 0.0
        %463 = vmatprep.subr.mxu0 0.0
        %464 = vmatpush1.msra.mxu0 0.0
        %465 = vmatprep.subr.mxu0 0.0
        %466 = vmatpush1.msra.mxu0 0.0
        %467 = vmatprep.subr.mxu0 0.0
        %468 = vmatpush1.msra.mxu0 0.0
        %469 = vmatprep.subr.mxu0 0.0
        %470 = vmatpush1.msra.mxu0 0.0
        %471 = vmatprep.subr.mxu0 0.0
        %472 = vmatpush1.msra.mxu0 0.0
        %473 = vmatprep.subr.mxu0 0.0
        %474 = vmatpush1.msra.mxu0 0.0
        %475 = vmatprep.subr.mxu0 0.0
        %476 = vmatpush1.msra.mxu0 0.0
        %477 = vmatprep.subr.mxu0 0.0
        %478 = vmatpush1.msra.mxu0 0.0
        %479 = vmatprep.subr.mxu0 0.0
        %480 = vmatpush1.msra.mxu0 0.0
        %481 = vmatprep.subr.mxu0 0.0
        %482 = vmatpush1.msra.mxu0 0.0
        %483 = vmatprep.subr.mxu0 0.0
        %484 = vmatpush1.msra.mxu0 0.0
        %485 = vmatprep.subr.mxu0 0.0
        %486 = vmatpush1.msra.mxu0 0.0
        %487 = vmatprep.subr.mxu0 0.0
        %488 = vmatpush1.msra.mxu0 0.0
        %489 = vmatprep.subr.mxu0 0.0
        %490 = vmatpush1.msra.mxu0 0.0
        %491 = vmatprep.mubr.f32.mxu0 0.0
        %492 = vmatmul.mubr.f32.gmra.mrb[0].mxu0 %v269
        %v493 = vpop.f32.mrb[0].mxu0
        %v494 = vadd.f32 %v347, %v493
        %v495 = vpop.f32.mrb[0].mxu0
        %v496 = vadd.f32 %v351, %v495
        %497 = vdwg.mxu0
        %v498 = vmul.f32 %v423, 0.5
        %v499 = vmul.f32 %v425, 0.5
        %v500 = vmul.f32 %v494, 0.5
        %v501 = vmul.f32 %v496, 0.5
        %v502 = vmul.f32 %v423, 0.044715
        %v503 = vmul.f32 %v425, 0.044715
        %v504 = vmul.f32 %v494, 0.044715
        %v505 = vmul.f32 %v496, 0.044715
        %v506 = vmul.f32 %v502, %v423
        %v507 = vmul.f32 %v503, %v425
        %v508 = vmul.f32 %v504, %v494
        %v509 = vmul.f32 %v505, %v496
        %v510 = vmul.f32 %v506, %v423
        %v511 = vmul.f32 %v507, %v425
        %v512 = vmul.f32 %v508, %v494
        %v513 = vmul.f32 %v509, %v496
        %v514 = vadd.f32 %v423, %v510
        %v515 = vadd.f32 %v425, %v511
        %v516 = vadd.f32 %v494, %v512
        %v517 = vadd.f32 %v496, %v513
        %v518 = vmul.f32 %v514, 0.7978846
        %v519 = vmul.f32 %v515, 0.7978846
        %v520 = vmul.f32 %v516, 0.7978846
        %v521 = vmul.f32 %v517, 0.7978846
        %v522 = vtanh.pop %v518
        %v523 = vtanh.pop %v519
        %v524 = vtanh.pop %v520
        %v525 = vtanh.pop %v521
        %v526 = vadd.f32 %v522, 1.0
        %v527 = vadd.f32 %v523, 1.0
        %v528 = vadd.f32 %v524, 1.0
        %v529 = vadd.f32 %v525, 1.0
        %v530 = vmul.f32 %v498, %v526
        %v531 = vmul.f32 %v499, %v527
        %v532 = vmul.f32 %v500, %v528
        %v533 = vmul.f32 %v501, %v529
        %v534 = vld [vmem:[#allocation7] sm:$0xff]
        %v535 = vld [vmem:[#allocation7 + $0x8] sm:$0xff]
        %v536 = vld [vmem:[#allocation7 + $0x10] sm:$0xff]
        %v537 = vld [vmem:[#allocation7 + $0x18] sm:$0xff]
        %v538 = vld [vmem:[#allocation7 + $0x20] sm:$0xff]
        %v539 = vld [vmem:[#allocation7 + $0x28] sm:$0xff]
        %v540 = vld [vmem:[#allocation7 + $0x30] sm:$0xff]
        %v541 = vld [vmem:[#allocation7 + $0x38] sm:$0xff]
        %v542 = vld [vmem:[#allocation7 + $0x40] sm:$0xff]
        %v543 = vld [vmem:[#allocation7 + $0x48] sm:$0xff]
        %v544 = vld [vmem:[#allocation7 + $0x50] sm:$0xff]
        %v545 = vld [vmem:[#allocation7 + $0x58] sm:$0xff]
        %v546 = vld [vmem:[#allocation7 + $0x60] sm:$0xff]
        %v547 = vld [vmem:[#allocation7 + $0x68] sm:$0xff]
        %v548 = vld [vmem:[#allocation7 + $0x70] sm:$0xff]
        %v549 = vld [vmem:[#allocation7 + $0x78] sm:$0xff]
        %v550 = vld [vmem:[#allocation7 + $0x80] sm:$0xff]
        %v551 = vld [vmem:[#allocation7 + $0x88] sm:$0xff]
        %v552 = vld [vmem:[#allocation7 + $0x90] sm:$0xff]
        %v553 = vld [vmem:[#allocation7 + $0x98] sm:$0xff]
        %v554 = vld [vmem:[#allocation7 + $0xa0] sm:$0xff]
        %v555 = vld [vmem:[#allocation7 + $0xa8] sm:$0xff]
        %v556 = vld [vmem:[#allocation7 + $0xb0] sm:$0xff]
        %v557 = vld [vmem:[#allocation7 + $0xb8] sm:$0xff]
        %v558 = vld [vmem:[#allocation7 + $0xc0] sm:$0xff]
        %v559 = vld [vmem:[#allocation7 + $0xc8] sm:$0xff]
        %v560 = vld [vmem:[#allocation7 + $0xd0] sm:$0xff]
        %v561 = vld [vmem:[#allocation7 + $0xd8] sm:$0xff]
        %v562 = vld [vmem:[#allocation7 + $0xe0] sm:$0xff]
        %v563 = vld [vmem:[#allocation7 + $0xe8] sm:$0xff]
        %v564 = vld [vmem:[#allocation7 + $0xf0] sm:$0xff]
        %v565 = vld [vmem:[#allocation7 + $0xf8] sm:$0xff]
        %v566 = vld [vmem:[#allocation7 + $0x100] sm:$0xff]
        %v567 = vld [vmem:[#allocation7 + $0x108] sm:$0xff]
        %v568 = vld [vmem:[#allocation7 + $0x110] sm:$0xff]
        %v569 = vld [vmem:[#allocation7 + $0x118] sm:$0xff]
        %v570 = vld [vmem:[#allocation7 + $0x120] sm:$0xff]
        %v571 = vld [vmem:[#allocation7 + $0x128] sm:$0xff]
        %v572 = vld [vmem:[#allocation7 + $0x130] sm:$0xff]
        %v573 = vld [vmem:[#allocation7 + $0x138] sm:$0xff]
        %v574 = vld [vmem:[#allocation7 + $0x140] sm:$0xff]
        %v575 = vld [vmem:[#allocation7 + $0x148] sm:$0xff]
        %v576 = vld [vmem:[#allocation7 + $0x150] sm:$0xff]
        %v577 = vld [vmem:[#allocation7 + $0x158] sm:$0xff]
        %v578 = vld [vmem:[#allocation7 + $0x160] sm:$0xff]
        %v579 = vld [vmem:[#allocation7 + $0x168] sm:$0xff]
        %v580 = vld [vmem:[#allocation7 + $0x170] sm:$0xff]
        %v581 = vld [vmem:[#allocation7 + $0x178] sm:$0xff]
        %v582 = vld [vmem:[#allocation7 + $0x180] sm:$0xff]
        %v583 = vld [vmem:[#allocation7 + $0x188] sm:$0xff]
        %v584 = vld [vmem:[#allocation7 + $0x190] sm:$0xff]
        %v585 = vld [vmem:[#allocation7 + $0x198] sm:$0xff]
        %v586 = vld [vmem:[#allocation7 + $0x1a0] sm:$0xff]
        %v587 = vld [vmem:[#allocation7 + $0x1a8] sm:$0xff]
        %v588 = vld [vmem:[#allocation7 + $0x1b0] sm:$0xff]
        %v589 = vld [vmem:[#allocation7 + $0x1b8] sm:$0xff]
        %v590 = vld [vmem:[#allocation7 + $0x1c0] sm:$0xff]
        %v591 = vld [vmem:[#allocation7 + $0x1c8] sm:$0xff]
        %v592 = vld [vmem:[#allocation7 + $0x1d0] sm:$0xff]
        %v593 = vld [vmem:[#allocation7 + $0x1d8] sm:$0xff]
        %v594 = vld [vmem:[#allocation7 + $0x1e0] sm:$0xff]
        %v595 = vld [vmem:[#allocation7 + $0x1e8] sm:$0xff]
        %v596 = vld [vmem:[#allocation7 + $0x1f0] sm:$0xff]
        %v597 = vld [vmem:[#allocation7 + $0x1f8] sm:$0xff]
        %v598 = vld [vmem:[%s4] sm:$0x1]
        %v600 = vlaneseq
        %v601 = vshrl.u32 %v600, 7
        %v602 = vsub.s32 0, %v601
        %v603 = vrot.slane %v598, %v602
        %605 = vmatprep.subr.mxu0 0.0
        %606 = vmatpush1.msra.mxu0 %v534
        %607 = vmatprep.subr.mxu0 0.0
        %608 = vmatpush1.msra.mxu0 %v535
        %609 = vmatprep.subr.mxu0 0.0
        %610 = vmatpush1.msra.mxu0 %v536
        %611 = vmatprep.subr.mxu0 0.0
        %612 = vmatpush1.msra.mxu0 %v537
        %613 = vmatprep.subr.mxu0 0.0
        %614 = vmatpush1.msra.mxu0 %v538
        %615 = vmatprep.subr.mxu0 0.0
        %616 = vmatpush1.msra.mxu0 %v539
        %617 = vmatprep.subr.mxu0 0.0
        %618 = vmatpush1.msra.mxu0 %v540
        %619 = vmatprep.subr.mxu0 0.0
        %620 = vmatpush1.msra.mxu0 %v541
        %621 = vmatprep.subr.mxu0 0.0
        %622 = vmatpush1.msra.mxu0 %v542
        %623 = vmatprep.subr.mxu0 0.0
        %624 = vmatpush1.msra.mxu0 %v543
        %625 = vmatprep.subr.mxu0 0.0
        %626 = vmatpush1.msra.mxu0 %v544
        %627 = vmatprep.subr.mxu0 0.0
        %628 = vmatpush1.msra.mxu0 %v545
        %629 = vmatprep.subr.mxu0 0.0
        %630 = vmatpush1.msra.mxu0 %v546
        %631 = vmatprep.subr.mxu0 0.0
        %632 = vmatpush1.msra.mxu0 %v547
        %633 = vmatprep.subr.mxu0 0.0
        %634 = vmatpush1.msra.mxu0 %v548
        %635 = vmatprep.subr.mxu0 0.0
        %636 = vmatpush1.msra.mxu0 %v549
        %637 = vmatprep.subr.mxu0 0.0
        %638 = vmatpush1.msra.mxu0 %v550
        %639 = vmatprep.subr.mxu0 0.0
        %640 = vmatpush1.msra.mxu0 %v551
        %641 = vmatprep.subr.mxu0 0.0
        %642 = vmatpush1.msra.mxu0 %v552
        %643 = vmatprep.subr.mxu0 0.0
        %644 = vmatpush1.msra.mxu0 %v553
        %645 = vmatprep.subr.mxu0 0.0
        %646 = vmatpush1.msra.mxu0 %v554
        %647 = vmatprep.subr.mxu0 0.0
        %648 = vmatpush1.msra.mxu0 %v555
        %649 = vmatprep.subr.mxu0 0.0
        %650 = vmatpush1.msra.mxu0 %v556
        %651 = vmatprep.subr.mxu0 0.0
        %652 = vmatpush1.msra.mxu0 %v557
        %653 = vmatprep.subr.mxu0 0.0
        %654 = vmatpush1.msra.mxu0 %v558
        %655 = vmatprep.subr.mxu0 0.0
        %656 = vmatpush1.msra.mxu0 %v559
        %657 = vmatprep.subr.mxu0 0.0
        %658 = vmatpush1.msra.mxu0 %v560
        %659 = vmatprep.subr.mxu0 0.0
        %660 = vmatpush1.msra.mxu0 %v561
        %661 = vmatprep.subr.mxu0 0.0
        %662 = vmatpush1.msra.mxu0 %v562
        %663 = vmatprep.subr.mxu0 0.0
        %664 = vmatpush1.msra.mxu0 %v563
        %665 = vmatprep.subr.mxu0 0.0
        %666 = vmatpush1.msra.mxu0 %v564
        %667 = vmatprep.subr.mxu0 0.0
        %668 = vmatpush1.msra.mxu0 %v565
        %669 = vmatprep.mubr.f32.mxu0 %v531
        %670 = vmatmul.mubr.f32.gmra.mrb[0].mxu0 %v530
        %v671 = vpop.f32.mrb[0].mxu0
        %v672 = vadd.f32 %v603, %v671
        %v673 = vpop.f32.mrb[0].mxu0
        %674 = vdwg.mxu0
        %675 = vmatprep.subr.mxu0 0.0
        %676 = vmatpush1.msra.mxu0 %v566
        %677 = vmatprep.subr.mxu0 0.0
        %678 = vmatpush1.msra.mxu0 %v567
        %679 = vmatprep.subr.mxu0 0.0
        %680 = vmatpush1.msra.mxu0 %v568
        %681 = vmatprep.subr.mxu0 0.0
        %682 = vmatpush1.msra.mxu0 %v569
        %683 = vmatprep.subr.mxu0 0.0
        %684 = vmatpush1.msra.mxu0 %v570
        %685 = vmatprep.subr.mxu0 0.0
        %686 = vmatpush1.msra.mxu0 %v571
        %687 = vmatprep.subr.mxu0 0.0
        %688 = vmatpush1.msra.mxu0 %v572
        %689 = vmatprep.subr.mxu0 0.0
        %690 = vmatpush1.msra.mxu0 %v573
        %691 = vmatprep.subr.mxu0 0.0
        %692 = vmatpush1.msra.mxu0 %v574
        %693 = vmatprep.subr.mxu0 0.0
        %694 = vmatpush1.msra.mxu0 %v575
        %695 = vmatprep.subr.mxu0 0.0
        %696 = vmatpush1.msra.mxu0 %v576
        %697 = vmatprep.subr.mxu0 0.0
        %698 = vmatpush1.msra.mxu0 %v577
        %699 = vmatprep.subr.mxu0 0.0
        %700 = vmatpush1.msra.mxu0 %v578
        %701 = vmatprep.subr.mxu0 0.0
        %702 = vmatpush1.msra.mxu0 %v579
        %703 = vmatprep.subr.mxu0 0.0
        %704 = vmatpush1.msra.mxu0 %v580
        %705 = vmatprep.subr.mxu0 0.0
        %706 = vmatpush1.msra.mxu0 %v581
        %707 = vmatprep.subr.mxu0 0.0
        %708 = vmatpush1.msra.mxu0 %v582
        %709 = vmatprep.subr.mxu0 0.0
        %710 = vmatpush1.msra.mxu0 %v583
        %711 = vmatprep.subr.mxu0 0.0
        %712 = vmatpush1.msra.mxu0 %v584
        %713 = vmatprep.subr.mxu0 0.0
        %714 = vmatpush1.msra.mxu0 %v585
        %715 = vmatprep.subr.mxu0 0.0
        %716 = vmatpush1.msra.mxu0 %v586
        %717 = vmatprep.subr.mxu0 0.0
        %718 = vmatpush1.msra.mxu0 %v587
        %719 = vmatprep.subr.mxu0 0.0
        %720 = vmatpush1.msra.mxu0 %v588
        %721 = vmatprep.subr.mxu0 0.0
        %722 = vmatpush1.msra.mxu0 %v589
        %723 = vmatprep.subr.mxu0 0.0
        %724 = vmatpush1.msra.mxu0 %v590
        %725 = vmatprep.subr.mxu0 0.0
        %726 = vmatpush1.msra.mxu0 %v591
        %727 = vmatprep.subr.mxu0 0.0
        %728 = vmatpush1.msra.mxu0 %v592
        %729 = vmatprep.subr.mxu0 0.0
        %730 = vmatpush1.msra.mxu0 %v593
        %731 = vmatprep.subr.mxu0 0.0
        %732 = vmatpush1.msra.mxu0 %v594
        %733 = vmatprep.subr.mxu0 0.0
        %734 = vmatpush1.msra.mxu0 %v595
        %735 = vmatprep.subr.mxu0 0.0
        %736 = vmatpush1.msra.mxu0 %v596
        %737 = vmatprep.subr.mxu0 0.0
        %738 = vmatpush1.msra.mxu0 %v597
        %739 = vmatprep.mubr.f32.mxu0 %v533
        %740 = vmatmul.mubr.f32.gmra.mrb[0].mxu0 %v532
        %v741 = vpop.f32.mrb[0].mxu0
        %v742 = vadd.f32 %v672, %v741
        %v743 = vpop.f32.mrb[0].mxu0
        %744 = vdwg.mxu0
        %745 = vst [vmem:[%s268] sm:$0xff] %v742
        %s746 = sand.u32 %s141, 1
        %s747 = scalar_lea.sflag [#allocation4], %s746
        %s748 = sand.u32 %s141, 1
        %s749 = smul.addr %s748, 8
        %s750 = scalar_lea.vmem [#allocation8], %s749
        // Predicated region
        $region53: #{tpu_custom_call.1} parent=39 // pred_check
          %p751 = pneg %p151
        $region54: #{tpu_custom_call.1} parent=39 // pred_check_branch
          %753 = sbr.rel (%p751) target = $region56
        $region55: #{tpu_custom_call.1} parent=39 // pred_region
          %s755 = ssub.s32 128, 128
          %756 = vsyncadd %s747, %s755
          %s757 = smul.addr %s23, 128
          %s758 = scalar_lea.hbm %s5, %s757
          %s760 = sshll.u32 %s750, 4
          %s761 = int_to_ptr.vmem [resolvable:$true] %s760
          %763 = dma.vmem_to_hbm [thread:$0]  %s761, 128, %s758, %s747
        $region56: #{tpu_custom_call.1} parent=39 // pred_fallthru
          _
      $region40: #{tpu_custom_call.1} parent=5 // pred_fallthru
        _
      %p764 = scmp.le.s32.totalorder 2, %s18
      // Predicated region
      $region57: #{tpu_custom_call.1} parent=5 // pred_check
        %p765 = pneg %p764
      $region58: #{tpu_custom_call.1} parent=5 // pred_check_branch
        %767 = sbr.rel (%p765) target = $region60
      $region59: #{tpu_custom_call.1} parent=5 // pred_region
        %s768 = ssub.s32 %s18, 2
        // Predicated region
        $region61: #{tpu_custom_call.1} parent=59 // pred_check
          %p769 = pneg %p157
        $region62: #{tpu_custom_call.1} parent=59 // pred_check_branch
          %771 = sbr.rel (%p769) target = $region64
        $region63: #{tpu_custom_call.1} parent=59 // pred_region
          %s772 = sand.u32 %s142, 1
          %s773 = scalar_lea.sflag [#allocation4], %s772
          %s774 = sand.u32 %s142, 1
          %s775 = smul.addr %s774, 8
          %s776 = scalar_lea.vmem [#allocation8], %s775
          %777 = dma.done %s773, 128
        $region64: #{tpu_custom_call.1} parent=59 // pred_fallthru
          _
      $region60: #{tpu_custom_call.1} parent=5 // pred_fallthru
        _
    $region6: #{tpu_custom_call.1} parent=1 // loop_footer
      %s22 = sadd.s32 1, %s18
    $region7: #{tpu_custom_call.1} parent=1 // loop_footer_branch
      %17 = sbr.rel target = $region3
    $region8: #{tpu_custom_call.1} parent=1 // loop_exit
      _
    %778 = vsyncpa [#allocation3], 1
    %s779 = scalar_lea.sflag [#allocation3], 1
    %780 = vsyncpa %s779, 1
    %781 = vsyncpa [#allocation6], 1
    %782 = vsyncpa [#allocation4], 1
    %s783 = scalar_lea.sflag [#allocation4], 1
    %784 = vsyncpa %s783, 1

</llo_original>
